<compile_context>
chip_gen: v5e
topology: v5e:2x2
jax: 0.10.0
libtpu: 0.0.40
codegen_flags: <defaults>
</compile_context>

<pallas_src>
import functools

import jax
import jax.numpy as jnp
from jax.experimental import pallas as pl
from jax.experimental.pallas import tpu as pltpu

_DEFAULT_EPS = 1e-5


def _round_up(x, m):
    return ((x + m - 1) // m) * m


def _vmem_limit_bytes():
    """Generation-aware VMEM budget: ~48 MiB on 128 MiB parts, 32 MiB on v7x."""
    try:
        cap = int(pltpu.get_tpu_info().vmem_capacity_bytes)
    except Exception:
        cap = 128 * 1024 * 1024
    return min(48 * 1024 * 1024, cap // 2)


# ----------------------------- Pallas kernels ------------------------------ #

def _bn_stats_kernel(x_ref, g_ref, b_ref,
                     scale_ref, shift_ref, mean_ref, var_ref,
                     sum_ref, sq_ref, *, inv_count, eps):
    """Accumulate per-channel sum / sumsq over row tiles; emit scale/shift."""
    ri = pl.program_id(1)

    @pl.when(ri == 0)
    def _():
        sum_ref[...] = jnp.zeros_like(sum_ref)
        sq_ref[...] = jnp.zeros_like(sq_ref)

    x = x_ref[...]                                        # (tm, tc) f32
    ones = jnp.ones((1, x.shape[0]), jnp.float32)
    # Column reductions ride the MXU instead of the XLU/VPU.
    sum_ref[...] += jnp.dot(ones, x, preferred_element_type=jnp.float32)
    sq_ref[...] += jnp.dot(ones, x * x, preferred_element_type=jnp.float32)

    @pl.when(ri == pl.num_programs(1) - 1)
    def _():
        mean = sum_ref[...] * inv_count
        # One-pass biased variance, clamped to avoid rsqrt of a tiny negative.
        var = jnp.maximum(sq_ref[...] * inv_count - mean * mean, 0.0)
        inv_std = jax.lax.rsqrt(var + eps)
        scale = g_ref[...] * inv_std
        scale_ref[...] = scale
        shift_ref[...] = b_ref[...] - mean * scale
        mean_ref[...] = mean
        var_ref[...] = var


def _bn_apply_kernel(x_ref, scale_ref, shift_ref, o_ref):
    """y = x * scale + shift (per-channel affine), fully parallel tiles."""
    o_ref[...] = x_ref[...] * scale_ref[...] + shift_ref[...]


# ------------------------------- wrapper ----------------------------------- #

def meta_batch_norm1d_forward(x, weight, bias,
                              running_mean=None, running_var=None,
                              *, momentum=0.1, eps=_DEFAULT_EPS,
                              block_m=512, block_c=128):
    """Training-mode BatchNorm1d forward.

    x: (N, C) or (N, C, L).  Returns (y, (new_running_mean, new_running_var)).
    The running-stat update mirrors PyTorch's buffer side effect (unbiased var,
    EMA with `momentum`) and does not affect y.
    """
    if x.ndim == 2:
        x2 = x.astype(jnp.float32)
    elif x.ndim == 3:
        # (N, C, L) -> (N*L, C): channels land on the 128-lane axis.
        x2 = jnp.transpose(x, (0, 2, 1)).reshape(-1, x.shape[1]).astype(jnp.float32)
    else:
        raise ValueError("BatchNorm1d expects 2-D (N, C) or 3-D (N, C, L) input")

    rows, C = x2.shape
    tc = block_c
    c_pad = _round_up(C, tc)
    tm = min(block_m, _round_up(rows, 8))
    m_pad = _round_up(rows, tm)

    # Zero padding: padded rows/channels add 0 to sum & sumsq -> stats unbiased.
    xp = jnp.pad(x2, ((0, m_pad - rows), (0, c_pad - C)))
    g = jnp.pad(weight.astype(jnp.float32).reshape(1, C), ((0, 0), (0, c_pad - C)))
    b = jnp.pad(bias.astype(jnp.float32).reshape(1, C), ((0, 0), (0, c_pad - C)))

    grid = (c_pad // tc, m_pad // tm)
    vmem_limit = _vmem_limit_bytes()
    vec_shape = jax.ShapeDtypeStruct((1, c_pad), jnp.float32)

    # ---- pass 1: per-channel statistics -> fused scale / shift ------------- #
    scale, shift, mean, var = pl.pallas_call(
        functools.partial(_bn_stats_kernel,
                          inv_count=1.0 / float(rows), eps=float(eps)),
        out_shape=(vec_shape, vec_shape, vec_shape, vec_shape),
        grid_spec=pltpu.PrefetchScalarGridSpec(
            num_scalar_prefetch=0,
            grid=grid,
            in_specs=[
                pl.BlockSpec((tm, tc), lambda c, r: (r, c)),   # x tile
                pl.BlockSpec((1, tc), lambda c, r: (0, c)),    # gamma
                pl.BlockSpec((1, tc), lambda c, r: (0, c)),    # beta
            ],
            out_specs=[pl.BlockSpec((1, tc), lambda c, r: (0, c))] * 4,
            scratch_shapes=[pltpu.VMEM((1, tc), jnp.float32),   # sum
                            pltpu.VMEM((1, tc), jnp.float32)],  # sumsq
        ),
        compiler_params=pltpu.CompilerParams(
            dimension_semantics=("parallel", "arbitrary"),
            vmem_limit_bytes=vmem_limit),
    )(xp, g, b)

    # ---- pass 2: normalize (fully parallel, lane-dense output) ------------- #
    y_pad = pl.pallas_call(
        _bn_apply_kernel,
        out_shape=jax.ShapeDtypeStruct((m_pad, c_pad), jnp.float32),
        grid_spec=pltpu.PrefetchScalarGridSpec(
            num_scalar_prefetch=0,
            grid=grid,
            in_specs=[
                pl.BlockSpec((tm, tc), lambda c, r: (r, c)),
                pl.BlockSpec((1, tc), lambda c, r: (0, c)),
                pl.BlockSpec((1, tc), lambda c, r: (0, c)),
            ],
            out_specs=pl.BlockSpec((tm, tc), lambda c, r: (r, c)),
        ),
        compiler_params=pltpu.CompilerParams(
            dimension_semantics=("parallel", "parallel"),
            vmem_limit_bytes=vmem_limit),
    )(xp, scale, shift)

    y2 = y_pad[:rows, :C]
    if x.ndim == 3:
        N, _, L = x.shape
        y = jnp.transpose(y2.reshape(N, L, C), (0, 2, 1)).astype(x.dtype)
    else:
        y = y2.astype(x.dtype)

    batch_mean = mean[0, :C]
    batch_var = var[0, :C]
    if running_mean is not None and running_var is not None:
        bessel = float(rows) / float(max(rows - 1, 1))   # unbiased var for EMA
        new_rm = (1.0 - momentum) * running_mean + momentum * batch_mean
        new_rv = (1.0 - momentum) * running_var + momentum * (batch_var * bessel)
    else:
        new_rm, new_rv = None, None
    return y, (new_rm, new_rv)


# ------------------------------ reference ---------------------------------- #

def _reference_batch_norm(x, weight, bias, eps):
    axes = (0,) if x.ndim == 2 else (0, 2)
    shape = (1, -1) if x.ndim == 2 else (1, -1, 1)
    mean = jnp.mean(x, axis=axes, keepdims=True)
    var = jnp.mean(jnp.square(x - mean), axis=axes, keepdims=True)
    return (x - mean) * jax.lax.rsqrt(var + eps) * weight.reshape(shape) + bias.reshape(shape)


if __name__ == "__main__":
    key = jax.random.PRNGKey(0)
    kx, kw, kb, kx2 = jax.random.split(key, 4)

    # 3-D BatchNorm1d input (N, C, L) — small but big enough to exercise the
    # row-tile grid (rows = N*L = 2048 -> 4 tiles of 512) and channel padding.
    N, C, L = 4, 32, 512
    x = jax.random.normal(kx, (N, C, L), jnp.float32) * 1.7 + 0.3
    weight = 1.0 + 0.1 * jax.random.normal(kw, (C,), jnp.float32)
    bias = 0.1 * jax.random.normal(kb, (C,), jnp.float32)
    running_mean = jnp.zeros((C,), jnp.float32)
    running_var = jnp.ones((C,), jnp.float32)

    y, (new_rm, new_rv) = meta_batch_norm1d_forward(
        x, weight, bias, running_mean, running_var, momentum=0.1)
    jax.block_until_ready((y, new_rm, new_rv))

    assert y.shape == x.shape and new_rm.shape == (C,) and new_rv.shape == (C,)
    assert bool(jnp.all(jnp.isfinite(y)))
    ref = _reference_batch_norm(x, weight, bias, _DEFAULT_EPS)
    assert bool(jnp.allclose(y, ref, atol=1e-4, rtol=1e-4))

    # 2-D BatchNorm1d input (N, C) path.
    x2 = jax.random.normal(kx2, (16, C), jnp.float32)
    y2, _ = meta_batch_norm1d_forward(x2, weight, bias)
    jax.block_until_ready(y2)
    ref2 = _reference_batch_norm(x2, weight, bias, _DEFAULT_EPS)
    assert bool(jnp.allclose(y2, ref2, atol=1e-4, rtol=1e-4))

    print("KERNEL_OK")
</pallas_src>

<mosaic_0001>
module attributes {stable_mosaic.version = 11 : i64} {
  func.func @_bn_stats_kernel(%arg0: i32, %arg1: i32, %arg2: memref<512x128xf32, #tpu.memory_space<vmem>>, %arg3: memref<1x128xf32, #tpu.memory_space<vmem>>, %arg4: memref<1x128xf32, #tpu.memory_space<vmem>>, %arg5: memref<1x128xf32, #tpu.memory_space<vmem>>, %arg6: memref<1x128xf32, #tpu.memory_space<vmem>>, %arg7: memref<1x128xf32, #tpu.memory_space<vmem>>, %arg8: memref<1x128xf32, #tpu.memory_space<vmem>>, %arg9: memref<1x128xf32, #tpu.memory_space<vmem>>, %arg10: memref<1x128xf32, #tpu.memory_space<vmem>>) attributes {dimension_semantics = [#tpu.dimension_semantics<parallel>, #tpu.dimension_semantics<arbitrary>], iteration_bounds = array<i64: 1, 4>, scalar_prefetch = 0 : i64, scratch_operands = 2 : i64, tpu.core_type = #tpu.core_type<tc>, window_params = [{transform_indices = @transform_0, window_bounds = array<i64: 512, 128>}, {transform_indices = @transform_1, window_bounds = array<i64: 1, 128>}, {transform_indices = @transform_2, window_bounds = array<i64: 1, 128>}, {transform_indices = @transform_3, window_bounds = array<i64: 1, 128>}, {transform_indices = @transform_4, window_bounds = array<i64: 1, 128>}, {transform_indices = @transform_5, window_bounds = array<i64: 1, 128>}, {transform_indices = @transform_6, window_bounds = array<i64: 1, 128>}]} {
    %c0_i32 = arith.constant 0 : i32
    %0 = arith.cmpi eq, %arg1, %c0_i32 : i32
    %1 = arith.extui %0 : i1 to i32
    %c0_i32_0 = arith.constant 0 : i32
    %2 = arith.cmpi ne, %1, %c0_i32_0 : i32
    scf.if %2 {
      %cst_13 = arith.constant 0.000000e+00 : f32
      %17 = vector.broadcast %cst_13 : f32 to vector<1x128xf32>
      %c0_14 = arith.constant 0 : index
      %c0_15 = arith.constant 0 : index
      %18 = vector.load %arg9[%c0_14, %c0_15] : memref<1x128xf32, #tpu.memory_space<vmem>>, vector<1x128xf32>
      tpu.vector_store %arg9[%c0_14, %c0_15], %17 {strides = array<i32>} : memref<1x128xf32, #tpu.memory_space<vmem>>, vector<1x128xf32>,
      %cst_16 = arith.constant 0.000000e+00 : f32
      %19 = vector.broadcast %cst_16 : f32 to vector<1x128xf32>
      %c0_17 = arith.constant 0 : index
      %c0_18 = arith.constant 0 : index
      %20 = vector.load %arg10[%c0_17, %c0_18] : memref<1x128xf32, #tpu.memory_space<vmem>>, vector<1x128xf32>
      tpu.vector_store %arg10[%c0_17, %c0_18], %19 {strides = array<i32>} : memref<1x128xf32, #tpu.memory_space<vmem>>, vector<1x128xf32>,
    } else {
    }
    %c0 = arith.constant 0 : index
    %c0_1 = arith.constant 0 : index
    %3 = vector.load %arg2[%c0, %c0_1] : memref<512x128xf32, #tpu.memory_space<vmem>>, vector<512x128xf32>
    %cst = arith.constant 1.000000e+00 : f32
    %4 = vector.broadcast %cst : f32 to vector<1x512xf32>
    %c0_2 = arith.constant 0 : index
    %c0_3 = arith.constant 0 : index
    %5 = vector.load %arg9[%c0_2, %c0_3] : memref<1x128xf32, #tpu.memory_space<vmem>>, vector<1x128xf32>
    %cst_4 = arith.constant dense<0.000000e+00> : vector<1x128xf32>
    %6 = tpu.matmul %4, %3, %cst_4 {dimension_numbers = #tpu.dot_dimension_numbers<[1], [0], [0], [1], [0, 0, 1, 1], [], []>} : vector<1x512xf32>, vector<512x128xf32>, vector<1x128xf32> -> vector<1x128xf32>
    %7 = arith.addf %5, %6 : vector<1x128xf32>
    %c0_5 = arith.constant 0 : index
    %c0_6 = arith.constant 0 : index
    %8 = vector.load %arg9[%c0_5, %c0_6] : memref<1x128xf32, #tpu.memory_space<vmem>>, vector<1x128xf32>
    tpu.vector_store %arg9[%c0_5, %c0_6], %7 {strides = array<i32>} : memref<1x128xf32, #tpu.memory_space<vmem>>, vector<1x128xf32>,
    %c0_7 = arith.constant 0 : index
    %c0_8 = arith.constant 0 : index
    %9 = vector.load %arg10[%c0_7, %c0_8] : memref<1x128xf32, #tpu.memory_space<vmem>>, vector<1x128xf32>
    %10 = arith.mulf %3, %3 : vector<512x128xf32>
    %cst_9 = arith.constant dense<0.000000e+00> : vector<1x128xf32>
    %11 = tpu.matmul %4, %10, %cst_9 {dimension_numbers = #tpu.dot_dimension_numbers<[1], [0], [0], [1], [0, 0, 1, 1], [], []>} : vector<1x512xf32>, vector<512x128xf32>, vector<1x128xf32> -> vector<1x128xf32>
    %12 = arith.addf %9, %11 : vector<1x128xf32>
    %c0_10 = arith.constant 0 : index
    %c0_11 = arith.constant 0 : index
    %13 = vector.load %arg10[%c0_10, %c0_11] : memref<1x128xf32, #tpu.memory_space<vmem>>, vector<1x128xf32>
    tpu.vector_store %arg10[%c0_10, %c0_11], %12 {strides = array<i32>} : memref<1x128xf32, #tpu.memory_space<vmem>>, vector<1x128xf32>,
    %c3_i32 = arith.constant 3 : i32
    %14 = arith.cmpi eq, %arg1, %c3_i32 : i32
    %15 = arith.extui %14 : i1 to i32
    %c0_i32_12 = arith.constant 0 : i32
    %16 = arith.cmpi ne, %15, %c0_i32_12 : i32
    scf.if %16 {
      %c0_13 = arith.constant 0 : index
      %c0_14 = arith.constant 0 : index
      %17 = vector.load %arg9[%c0_13, %c0_14] : memref<1x128xf32, #tpu.memory_space<vmem>>, vector<1x128xf32>
      %cst_15 = arith.constant 4.8828125E-4 : f32
      %18 = vector.broadcast %cst_15 : f32 to vector<1x128xf32>
      %19 = arith.mulf %17, %18 : vector<1x128xf32>
      %c0_16 = arith.constant 0 : index
      %c0_17 = arith.constant 0 : index
      %20 = vector.load %arg10[%c0_16, %c0_17] : memref<1x128xf32, #tpu.memory_space<vmem>>, vector<1x128xf32>
      %cst_18 = arith.constant 4.8828125E-4 : f32
      %21 = vector.broadcast %cst_18 : f32 to vector<1x128xf32>
      %22 = arith.mulf %20, %21 : vector<1x128xf32>
      %23 = arith.mulf %19, %19 : vector<1x128xf32>
      %24 = arith.subf %22, %23 : vector<1x128xf32>
      %cst_19 = arith.constant 0.000000e+00 : f32
      %25 = vector.broadcast %cst_19 : f32 to vector<1x128xf32>
      %26 = arith.maximumf %24, %25 : vector<1x128xf32>
      %cst_20 = arith.constant 9.99999974E-6 : f32
      %27 = vector.broadcast %cst_20 : f32 to vector<1x128xf32>
      %28 = arith.addf %26, %27 : vector<1x128xf32>
      %29 = math.rsqrt %28 : vector<1x128xf32>
      %c0_21 = arith.constant 0 : index
      %c0_22 = arith.constant 0 : index
      %30 = vector.load %arg3[%c0_21, %c0_22] : memref<1x128xf32, #tpu.memory_space<vmem>>, vector<1x128xf32>
      %31 = arith.mulf %30, %29 : vector<1x128xf32>
      %c0_23 = arith.constant 0 : index
      %c0_24 = arith.constant 0 : index
      %32 = vector.load %arg5[%c0_23, %c0_24] : memref<1x128xf32, #tpu.memory_space<vmem>>, vector<1x128xf32>
      tpu.vector_store %arg5[%c0_23, %c0_24], %31 {strides = array<i32>} : memref<1x128xf32, #tpu.memory_space<vmem>>, vector<1x128xf32>,
      %c0_25 = arith.constant 0 : index
      %c0_26 = arith.constant 0 : index
      %33 = vector.load %arg4[%c0_25, %c0_26] : memref<1x128xf32, #tpu.memory_space<vmem>>, vector<1x128xf32>
      %34 = arith.mulf %19, %31 : vector<1x128xf32>
      %35 = arith.subf %33, %34 : vector<1x128xf32>
      %c0_27 = arith.constant 0 : index
      %c0_28 = arith.constant 0 : index
      %36 = vector.load %arg6[%c0_27, %c0_28] : memref<1x128xf32, #tpu.memory_space<vmem>>, vector<1x128xf32>
      tpu.vector_store %arg6[%c0_27, %c0_28], %35 {strides = array<i32>} : memref<1x128xf32, #tpu.memory_space<vmem>>, vector<1x128xf32>,
      %c0_29 = arith.constant 0 : index
      %c0_30 = arith.constant 0 : index
      %37 = vector.load %arg7[%c0_29, %c0_30] : memref<1x128xf32, #tpu.memory_space<vmem>>, vector<1x128xf32>
      tpu.vector_store %arg7[%c0_29, %c0_30], %19 {strides = array<i32>} : memref<1x128xf32, #tpu.memory_space<vmem>>, vector<1x128xf32>,
      %c0_31 = arith.constant 0 : index
      %c0_32 = arith.constant 0 : index
      %38 = vector.load %arg8[%c0_31, %c0_32] : memref<1x128xf32, #tpu.memory_space<vmem>>, vector<1x128xf32>
      tpu.vector_store %arg8[%c0_31, %c0_32], %26 {strides = array<i32>} : memref<1x128xf32, #tpu.memory_space<vmem>>, vector<1x128xf32>,
    } else {
    }
    return
  }
  func.func @transform_0(%arg0: i32, %arg1: i32) -> (i32, i32) {
    %c0_i32 = arith.constant 0 : i32
    return %arg1, %arg0 : i32, i32
  }
  func.func @transform_1(%arg0: i32, %arg1: i32) -> (i32, i32) {
    %c0_i32 = arith.constant 0 : i32
    %c0_i32_0 = arith.constant 0 : i32
    return %c0_i32, %arg0 : i32, i32
  }
  func.func @transform_2(%arg0: i32, %arg1: i32) -> (i32, i32) {
    %c0_i32 = arith.constant 0 : i32
    %c0_i32_0 = arith.constant 0 : i32
    return %c0_i32, %arg0 : i32, i32
  }
  func.func @transform_3(%arg0: i32, %arg1: i32) -> (i32, i32) {
    %c0_i32 = arith.constant 0 : i32
    %c0_i32_0 = arith.constant 0 : i32
    return %c0_i32, %arg0 : i32, i32
  }
  func.func @transform_4(%arg0: i32, %arg1: i32) -> (i32, i32) {
    %c0_i32 = arith.constant 0 : i32
    %c0_i32_0 = arith.constant 0 : i32
    return %c0_i32, %arg0 : i32, i32
  }
  func.func @transform_5(%arg0: i32, %arg1: i32) -> (i32, i32) {
    %c0_i32 = arith.constant 0 : i32
    %c0_i32_0 = arith.constant 0 : i32
    return %c0_i32, %arg0 : i32, i32
  }
  func.func @transform_6(%arg0: i32, %arg1: i32) -> (i32, i32) {
    %c0_i32 = arith.constant 0 : i32
    %c0_i32_0 = arith.constant 0 : i32
    return %c0_i32, %arg0 : i32, i32
  }
}

</mosaic_0001>

<llo_original>
// kernel: tpu_custom_call.1
$region0: #{tpu_custom_call.1}
  #allocation0 [shape = 'u32[]', space=smem, size = 0x4, offset = 0x4, fixed_abs, tag = 'smem constant byte address 0x4 - core index']
  #allocation1 [shape = 'u32[72,128]{1,0:T(1,128)}', space=vmem, size = 0x9000, scoped, tag = 'internal scratch']
  #allocation2 [shape = 'f32[1,128]{1,0:T(1,128)}', space=vmem, size = 0x200, scoped, tag = 'scratch operand']
  #allocation3 [shape = 'f32[1,128]{1,0:T(1,128)}', space=vmem, size = 0x200, scoped, tag = 'scratch operand']
  %s0 = inlined_call_operand.hbm [shape: f32[2048,128], index: 0, kind: input, shape index: {}]
  %s1 = inlined_call_operand.hbm [shape: f32[1,128], index: 1, kind: input, shape index: {}]
  %s2 = inlined_call_operand.vmem [shape: f32[1,128], index: 2, kind: input, shape index: {}]
  %s3 = inlined_call_operand.hbm [shape: f32[1,128], index: 3, kind: output, shape index: {0}]
  %s4 = inlined_call_operand.hbm [shape: f32[1,128], index: 4, kind: output, shape index: {1}]
  %s5 = inlined_call_operand.hbm [shape: f32[1,128], index: 5, kind: output, shape index: {2}]
  %s6 = inlined_call_operand.hbm [shape: f32[1,128], index: 6, kind: output, shape index: {3}]
  %7 = xla_tuple %s3, %s4, %s5, %s6
  %s8 = sld [smem:[#allocation0]]
  $region85: #{tpu_custom_call.1} parent=0
    _
  %s10 = ssub.s32 1, %s8
  %s11 = scalar_select 0, %s10, %s8
  $region1: #{tpu_custom_call.1} parent=0
    #allocation4 [shape = 'u8[524288]{0}', space=vmem, size = 0x80000, scoped, tag = 'input window, operand 0']
    #allocation5 [shape = 's32[2]{0}', space=sflag, size = 0x8, scoped, tag = 'scoped memory for tpu_custom_call.1']
    #allocation6 [shape = 's32[2]{0}', space=sflag, size = 0x8, scoped, tag = 'scoped memory for tpu_custom_call.1']
    #allocation7 [shape = 'u8[512]{0}', space=vmem, size = 0x400, scoped, tag = 'input window, operand 1, single buffered']
    #allocation8 [shape = 's32[1]{0}', space=sflag, size = 0x4, scoped, tag = 'scoped memory for tpu_custom_call.1']
    #allocation9 [shape = 'u8[512]{0}', space=vmem, size = 0x400, scoped, tag = 'output window, operand 0, single buffered']
    #allocation10 [shape = 'u8[512]{0}', space=vmem, size = 0x400, scoped, tag = 'output window, operand 1, single buffered']
    #allocation11 [shape = 's32[1]{0}', space=sflag, size = 0x4, scoped, tag = 'scoped memory for tpu_custom_call.1']
    #allocation12 [shape = 'u8[512]{0}', space=vmem, size = 0x400, scoped, tag = 'output window, operand 2, single buffered']
    #allocation13 [shape = 'u8[512]{0}', space=vmem, size = 0x400, scoped, tag = 'output window, operand 3, single buffered']
    #allocation14 [shape = 's32[1]{0}', space=sflag, size = 0x4, scoped, tag = 'scoped memory for tpu_custom_call.1']
    %12 = vsyncpa [#allocation5], 0
    %s13 = scalar_lea.sflag [#allocation5], 1
    %14 = vsyncpa %s13, 0
    %15 = vsyncpa [#allocation8], 0
    %16 = vsyncpa [#allocation6], 0
    %17 = vsyncpa [#allocation11], 0
    %18 = vsyncpa [#allocation14], 0
    loop: start=0, step=1, limit=6
    $region2: #{tpu_custom_call.1} parent=1 // loop_pre_header
      _
    $region3: #{tpu_custom_call.1} parent=1 // loop_header
      %s20 = sphi 0, %s24
      %p21 = scmp.ge.s32.totalorder %s20, 6
      %s27 = sphi 0, %s39
      %s28 = sphi 0, %s35
      %s29 = sphi 0, %s27
      %s30 = sphi 0, %s28
      %s31 = sphi 0, %s29
      %s32 = sphi 0, %s30
      %s44 = sphi 0, %s46
      %s47 = sphi 0, %s44
      %s48 = sphi 0, %s47
      %s64 = sphi 0, %s48
      %s70 = sphi 0, %s72
      %s73 = sphi 0, %s70
      %s74 = sphi 0, %s73
      %s90 = sphi 0, %s74
      %s96 = sphi 0, %s98
      %s99 = sphi 0, %s96
      %s100 = sphi 0, %s99
      %s116 = sphi 0, %s100
      %s122 = sphi 0, %s124
      %s125 = sphi 0, %s122
      %s126 = sphi 0, %s125
      %s142 = sphi 0, %s126
      %s148 = sphi 0, %s150
      %s151 = sphi 0, %s148
      %s152 = sphi 0, %s151
      %s168 = sphi 0, %s152
      %s174 = sphi 0, %s176
      %s177 = sphi 0, %s174
      %s178 = sphi 0, %s177
      %s194 = sphi 0, %s178
      %s200 = sphi 0, %s202
      %s203 = sphi 0, %s200
      %s204 = sphi 0, %s203
      %s220 = sphi 0, %s204
    $region4: #{tpu_custom_call.1} parent=1 // loop_header_branch
      %23 = sbr.rel (%p21) target = $region8
    $region5: #{tpu_custom_call.1} parent=1 // loop_body
      %s25 = ssub.s32 %s20, 1
      %s26 = ssub.s32 %s20, 2
      %s33 = sadd.s32 1, %s28
      %p34 = scmp.ge.s32.totalorder %s33, 4
      %s35 = scalar_select %p34, 0, %s33
      %s36 = sadd.s32 1, %s27
      %s37 = scalar_select %p34, %s36, %s27
      %p38 = scmp.ge.s32.totalorder %s37, 1
      %s39 = scalar_select %p38, 0, %s37
      %s40 = ssub.s32 %s28, %s35
      %s41 = ssub.s32 %s27, %s39
      %s42 = sor.u32 %s40, %s41
      %p43 = scmp.eq.s32.totalorder %s42, 0
      %s45 = sadd.s32 %s44, 1
      %s46 = scalar_select %p43, %s44, %s45
      %p49 = pneg %p43
      %p50 = scmp.eq.s32.totalorder %s20, 3
      %p51 = por %p49, %p50
      %p52 = scmp.ne.s32.totalorder %s44, %s47
      %p53 = scmp.eq.s32.totalorder %s20, 0
      %p54 = por %p52, %p53
      %p55 = scmp.ne.s32.totalorder %s44, %s47
      %p56 = scmp.eq.s32.totalorder %s25, 3
      %p57 = por %p55, %p56
      %p58 = scmp.ne.s32.totalorder %s47, %s48
      %p59 = scmp.eq.s32.totalorder %s25, 0
      %p60 = por %p58, %p59
      %p61 = scmp.ne.s32.totalorder %s47, %s48
      %p62 = scmp.eq.s32.totalorder %s26, 3
      %p63 = por %p61, %p62
      %p65 = scmp.ne.s32.totalorder %s48, %s64
      %p66 = scmp.eq.s32.totalorder %s26, 0
      %p67 = por %p65, %p66
      %s68 = ssub.s32 %s27, %s39
      %p69 = scmp.eq.s32.totalorder %s68, 0
      %s71 = sadd.s32 %s70, 1
      %s72 = scalar_select %p69, %s70, %s71
      %p75 = pneg %p69
      %p76 = scmp.eq.s32.totalorder %s20, 3
      %p77 = por %p75, %p76
      %p78 = scmp.ne.s32.totalorder %s70, %s73
      %p79 = scmp.eq.s32.totalorder %s20, 0
      %p80 = por %p78, %p79
      %p81 = scmp.ne.s32.totalorder %s70, %s73
      %p82 = scmp.eq.s32.totalorder %s25, 3
      %p83 = por %p81, %p82
      %p84 = scmp.ne.s32.totalorder %s73, %s74
      %p85 = scmp.eq.s32.totalorder %s25, 0
      %p86 = por %p84, %p85
      %p87 = scmp.ne.s32.totalorder %s73, %s74
      %p88 = scmp.eq.s32.totalorder %s26, 3
      %p89 = por %p87, %p88
      %p91 = scmp.ne.s32.totalorder %s74, %s90
      %p92 = scmp.eq.s32.totalorder %s26, 0
      %p93 = por %p91, %p92
      %s94 = ssub.s32 %s27, %s39
      %p95 = scmp.eq.s32.totalorder %s94, 0
      %s97 = sadd.s32 %s96, 1
      %s98 = scalar_select %p95, %s96, %s97
      %p101 = pneg %p95
      %p102 = scmp.eq.s32.totalorder %s20, 3
      %p103 = por %p101, %p102
      %p104 = scmp.ne.s32.totalorder %s96, %s99
      %p105 = scmp.eq.s32.totalorder %s20, 0
      %p106 = por %p104, %p105
      %p107 = scmp.ne.s32.totalorder %s96, %s99
      %p108 = scmp.eq.s32.totalorder %s25, 3
      %p109 = por %p107, %p108
      %p110 = scmp.ne.s32.totalorder %s99, %s100
      %p111 = scmp.eq.s32.totalorder %s25, 0
      %p112 = por %p110, %p111
      %p113 = scmp.ne.s32.totalorder %s99, %s100
      %p114 = scmp.eq.s32.totalorder %s26, 3
      %p115 = por %p113, %p114
      %p117 = scmp.ne.s32.totalorder %s100, %s116
      %p118 = scmp.eq.s32.totalorder %s26, 0
      %p119 = por %p117, %p118
      %s120 = ssub.s32 %s27, %s39
      %p121 = scmp.eq.s32.totalorder %s120, 0
      %s123 = sadd.s32 %s122, 1
      %s124 = scalar_select %p121, %s122, %s123
      %p127 = pneg %p121
      %p128 = scmp.eq.s32.totalorder %s20, 3
      %p129 = por %p127, %p128
      %p130 = scmp.ne.s32.totalorder %s122, %s125
      %p131 = scmp.eq.s32.totalorder %s20, 0
      %p132 = por %p130, %p131
      %p133 = scmp.ne.s32.totalorder %s122, %s125
      %p134 = scmp.eq.s32.totalorder %s25, 3
      %p135 = por %p133, %p134
      %p136 = scmp.ne.s32.totalorder %s125, %s126
      %p137 = scmp.eq.s32.totalorder %s25, 0
      %p138 = por %p136, %p137
      %p139 = scmp.ne.s32.totalorder %s125, %s126
      %p140 = scmp.eq.s32.totalorder %s26, 3
      %p141 = por %p139, %p140
      %p143 = scmp.ne.s32.totalorder %s126, %s142
      %p144 = scmp.eq.s32.totalorder %s26, 0
      %p145 = por %p143, %p144
      %s146 = ssub.s32 %s27, %s39
      %p147 = scmp.eq.s32.totalorder %s146, 0
      %s149 = sadd.s32 %s148, 1
      %s150 = scalar_select %p147, %s148, %s149
      %p153 = pneg %p147
      %p154 = scmp.eq.s32.totalorder %s20, 3
      %p155 = por %p153, %p154
      %p156 = scmp.ne.s32.totalorder %s148, %s151
      %p157 = scmp.eq.s32.totalorder %s20, 0
      %p158 = por %p156, %p157
      %p159 = scmp.ne.s32.totalorder %s148, %s151
      %p160 = scmp.eq.s32.totalorder %s25, 3
      %p161 = por %p159, %p160
      %p162 = scmp.ne.s32.totalorder %s151, %s152
      %p163 = scmp.eq.s32.totalorder %s25, 0
      %p164 = por %p162, %p163
      %p165 = scmp.ne.s32.totalorder %s151, %s152
      %p166 = scmp.eq.s32.totalorder %s26, 3
      %p167 = por %p165, %p166
      %p169 = scmp.ne.s32.totalorder %s152, %s168
      %p170 = scmp.eq.s32.totalorder %s26, 0
      %p171 = por %p169, %p170
      %s172 = ssub.s32 %s27, %s39
      %p173 = scmp.eq.s32.totalorder %s172, 0
      %s175 = sadd.s32 %s174, 1
      %s176 = scalar_select %p173, %s174, %s175
      %p179 = pneg %p173
      %p180 = scmp.eq.s32.totalorder %s20, 3
      %p181 = por %p179, %p180
      %p182 = scmp.ne.s32.totalorder %s174, %s177
      %p183 = scmp.eq.s32.totalorder %s20, 0
      %p184 = por %p182, %p183
      %p185 = scmp.ne.s32.totalorder %s174, %s177
      %p186 = scmp.eq.s32.totalorder %s25, 3
      %p187 = por %p185, %p186
      %p188 = scmp.ne.s32.totalorder %s177, %s178
      %p189 = scmp.eq.s32.totalorder %s25, 0
      %p190 = por %p188, %p189
      %p191 = scmp.ne.s32.totalorder %s177, %s178
      %p192 = scmp.eq.s32.totalorder %s26, 3
      %p193 = por %p191, %p192
      %p195 = scmp.ne.s32.totalorder %s178, %s194
      %p196 = scmp.eq.s32.totalorder %s26, 0
      %p197 = por %p195, %p196
      %s198 = ssub.s32 %s27, %s39
      %p199 = scmp.eq.s32.totalorder %s198, 0
      %s201 = sadd.s32 %s200, 1
      %s202 = scalar_select %p199, %s200, %s201
      %p205 = pneg %p199
      %p206 = scmp.eq.s32.totalorder %s20, 3
      %p207 = por %p205, %p206
      %p208 = scmp.ne.s32.totalorder %s200, %s203
      %p209 = scmp.eq.s32.totalorder %s20, 0
      %p210 = por %p208, %p209
      %p211 = scmp.ne.s32.totalorder %s200, %s203
      %p212 = scmp.eq.s32.totalorder %s25, 3
      %p213 = por %p211, %p212
      %p214 = scmp.ne.s32.totalorder %s203, %s204
      %p215 = scmp.eq.s32.totalorder %s25, 0
      %p216 = por %p214, %p215
      %p217 = scmp.ne.s32.totalorder %s203, %s204
      %p218 = scmp.eq.s32.totalorder %s26, 3
      %p219 = por %p217, %p218
      %p221 = scmp.ne.s32.totalorder %s204, %s220
      %p222 = scmp.eq.s32.totalorder %s26, 0
      %p223 = por %p221, %p222
      %p224 = scmp.le.s32.totalorder 1, %s20
      %p225 = scmp.lt.s32.totalorder %s20, 5
      %p226 = pnand %p224, %p225
      %p227 = pneg %p226
      // Predicated region
      $region9: #{tpu_custom_call.1} parent=5 // pred_check
        _
      $region10: #{tpu_custom_call.1} parent=5 // pred_check_branch
        %229 = sbr.rel (%p226) target = $region12
      $region11: #{tpu_custom_call.1} parent=5 // pred_region
        %s230 = ssub.s32 %s20, 1
        // Predicated region
        $region13: #{tpu_custom_call.1} parent=11 // pred_check
          %p231 = pneg %p86
        $region14: #{tpu_custom_call.1} parent=11 // pred_check_branch
          %233 = sbr.rel (%p231) target = $region16
        $region15: #{tpu_custom_call.1} parent=11 // pred_region
          %235 = vsyncadd [#allocation8], 0
          %s236 = scalar_lea.hbm %s1, %s29
          %s238 = sshll.u32 %s236, 4
          %s239 = int_to_ptr.hbm [resolvable:$true] %s238
          %s240 = sshll.u32 [#allocation7], 4
          %s241 = int_to_ptr.vmem [resolvable:$true] %s240
          %243 = dma.hbm_to_vmem [thread:$0]  %s239, 16, %s241, [#allocation8]
        $region16: #{tpu_custom_call.1} parent=11 // pred_fallthru
          _
        // Predicated region
        $region17: #{tpu_custom_call.1} parent=11 // pred_check
          %p244 = pneg %p112
        $region18: #{tpu_custom_call.1} parent=11 // pred_check_branch
          %246 = sbr.rel (%p244) target = $region20
        $region19: #{tpu_custom_call.1} parent=11 // pred_region
          %p247 = scmp.lt.s32.totalorder %s29, 0
          %s248 = scalar_select %p247, %s29, 0
          %s249 = scalar_lea.vmem %s2, %s248
        $region20: #{tpu_custom_call.1} parent=11 // pred_fallthru
          _
      $region12: #{tpu_custom_call.1} parent=5 // pred_fallthru
        _
      %p250 = scmp.lt.s32.totalorder %s20, 4
      // Predicated region
      $region21: #{tpu_custom_call.1} parent=5 // pred_check
        %p251 = pneg %p250
      $region22: #{tpu_custom_call.1} parent=5 // pred_check_branch
        %253 = sbr.rel (%p251) target = $region24
      $region23: #{tpu_custom_call.1} parent=5 // pred_region
        // Predicated region
        $region25: #{tpu_custom_call.1} parent=23 // pred_check
          %p254 = pneg %p54
        $region26: #{tpu_custom_call.1} parent=23 // pred_check_branch
          %256 = sbr.rel (%p254) target = $region28
        $region27: #{tpu_custom_call.1} parent=23 // pred_region
          %s257 = sand.u32 %s44, 1
          %s258 = scalar_lea.sflag [#allocation5], %s257
          %s259 = sand.u32 %s44, 1
          %s260 = smul.addr %s259, 512
          %s261 = scalar_lea.vmem [#allocation4], %s260
          %s262 = smul.u32 64, %s28
          %264 = vsyncadd %s258, 0
          %s265 = sadd.s32 %s27, %s262
          %s266 = smul.addr %s265, 8
          %s267 = scalar_lea.hbm %s0, %s266
          %s268 = sshll.u32 %s267, 4
          %s269 = int_to_ptr.hbm [resolvable:$true] %s268
          %s270 = sshll.u32 %s261, 4
          %s271 = int_to_ptr.vmem [resolvable:$true] %s270
          %276 = dma.hbm_to_vmem [thread:$0]  %s269, 8192, %s271, %s258, 128, 128, 8
        $region28: #{tpu_custom_call.1} parent=23 // pred_fallthru
          _
      $region24: #{tpu_custom_call.1} parent=5 // pred_fallthru
        _
      %p277 = scmp.le.s32.totalorder 1, %s20
      %p278 = scmp.lt.s32.totalorder %s20, 5
      %p279 = pnand %p277, %p278
      %p280 = pneg %p279
      // Predicated region
      $region29: #{tpu_custom_call.1} parent=5 // pred_check
        _
      $region30: #{tpu_custom_call.1} parent=5 // pred_check_branch
        %282 = sbr.rel (%p279) target = $region32
      $region31: #{tpu_custom_call.1} parent=5 // pred_region
        %s283 = ssub.s32 %s20, 1
        %s284 = sand.u32 %s47, 1
        %s285 = scalar_lea.sflag [#allocation5], %s284
        %s286 = sand.u32 %s47, 1
        %s287 = smul.addr %s286, 512
        %s288 = scalar_lea.vmem [#allocation4], %s287
        // Predicated region
        $region33: #{tpu_custom_call.1} parent=31 // pred_check
          %p289 = pneg %p60
        $region34: #{tpu_custom_call.1} parent=31 // pred_check_branch
          %291 = sbr.rel (%p289) target = $region36
        $region35: #{tpu_custom_call.1} parent=31 // pred_region
          %293 = dma.done %s285, 8192
        $region36: #{tpu_custom_call.1} parent=31 // pred_fallthru
          _
        // Predicated region
        $region37: #{tpu_custom_call.1} parent=31 // pred_check
          %p294 = pneg %p86
        $region38: #{tpu_custom_call.1} parent=31 // pred_check_branch
          %296 = sbr.rel (%p294) target = $region40
        $region39: #{tpu_custom_call.1} parent=31 // pred_region
          %298 = dma.done [#allocation8], 16
        $region40: #{tpu_custom_call.1} parent=31 // pred_fallthru
          _
        %s299 = sand.u32 %s47, 1
        %s300 = scalar_lea.sflag [#allocation5], %s299
        %s301 = sand.u32 %s47, 1
        %s302 = smul.addr %s301, 512
        %s303 = scalar_lea.vmem [#allocation4], %s302
        %p304 = pneg %p60
        %p305 = pneg %p57
        %p306 = pneg %p86
        %p307 = pneg %p83
        %p308 = scmp.lt.s32.totalorder %s29, 0
        %s309 = scalar_select %p308, %s29, 0
        %s310 = scalar_lea.vmem %s2, %s309
        %p311 = pneg %p112
        %p312 = pneg %p109
        %p313 = pneg %p138
        %p314 = pneg %p135
        %p315 = pneg %p164
        %p316 = pneg %p161
        %p317 = pneg %p190
        %p318 = pneg %p187
        %p319 = pneg %p216
        %p320 = pneg %p213
        %s321 = smul.u32 64, %s30
        %p322 = scmp.lt.s32.totalorder %s29, 0
        %s323 = scalar_select %p322, %s29, 0
        %s324 = scalar_lea.vmem %s2, %s323
        %p325 = scmp.eq.s32.totalorder %s30, 0
        // Predicated region
        $region41: #{tpu_custom_call.1} parent=31 // pred_check
          %p326 = pneg %p325
        $region42: #{tpu_custom_call.1} parent=31 // pred_check_branch
          %328 = sbr.rel (%p326) target = $region44
        $region43: #{tpu_custom_call.1} parent=31 // pred_region
          %329 = vst [vmem:[#allocation2] sm:$0x1] 0.0
          %330 = vst [vmem:[#allocation3] sm:$0x1] 0.0
        $region44: #{tpu_custom_call.1} parent=31 // pred_fallthru
          _
        %v331 = vld [vmem:[%s288] sm:$0xff]
        %v332 = vld [vmem:[%s288 + $0x8] sm:$0xff]
        %v333 = vld [vmem:[%s288 + $0x10] sm:$0xff]
        %v334 = vld [vmem:[%s288 + $0x18] sm:$0xff]
        %v335 = vld [vmem:[%s288 + $0x20] sm:$0xff]
        %v336 = vld [vmem:[%s288 + $0x28] sm:$0xff]
        %v337 = vld [vmem:[%s288 + $0x30] sm:$0xff]
        %v338 = vld [vmem:[%s288 + $0x38] sm:$0xff]
        %v339 = vld [vmem:[%s288 + $0x40] sm:$0xff]
        %v340 = vld [vmem:[%s288 + $0x48] sm:$0xff]
        %v341 = vld [vmem:[%s288 + $0x50] sm:$0xff]
        %v342 = vld [vmem:[%s288 + $0x58] sm:$0xff]
        %v343 = vld [vmem:[%s288 + $0x60] sm:$0xff]
        %v344 = vld [vmem:[%s288 + $0x68] sm:$0xff]
        %v345 = vld [vmem:[%s288 + $0x70] sm:$0xff]
        %v346 = vld [vmem:[%s288 + $0x78] sm:$0xff]
        %v347 = vld [vmem:[%s288 + $0x80] sm:$0xff]
        %v348 = vld [vmem:[%s288 + $0x88] sm:$0xff]
        %v349 = vld [vmem:[%s288 + $0x90] sm:$0xff]
        %v350 = vld [vmem:[%s288 + $0x98] sm:$0xff]
        %v351 = vld [vmem:[%s288 + $0xa0] sm:$0xff]
        %v352 = vld [vmem:[%s288 + $0xa8] sm:$0xff]
        %v353 = vld [vmem:[%s288 + $0xb0] sm:$0xff]
        %v354 = vld [vmem:[%s288 + $0xb8] sm:$0xff]
        %v355 = vld [vmem:[%s288 + $0xc0] sm:$0xff]
        %v356 = vld [vmem:[%s288 + $0xc8] sm:$0xff]
        %v357 = vld [vmem:[%s288 + $0xd0] sm:$0xff]
        %v358 = vld [vmem:[%s288 + $0xd8] sm:$0xff]
        %v359 = vld [vmem:[%s288 + $0xe0] sm:$0xff]
        %v360 = vld [vmem:[%s288 + $0xe8] sm:$0xff]
        %v361 = vld [vmem:[%s288 + $0xf0] sm:$0xff]
        %v362 = vld [vmem:[%s288 + $0xf8] sm:$0xff]
        %v363 = vld [vmem:[%s288 + $0x100] sm:$0xff]
        %v364 = vld [vmem:[%s288 + $0x108] sm:$0xff]
        %v365 = vld [vmem:[%s288 + $0x110] sm:$0xff]
        %v366 = vld [vmem:[%s288 + $0x118] sm:$0xff]
        %v367 = vld [vmem:[%s288 + $0x120] sm:$0xff]
        %v368 = vld [vmem:[%s288 + $0x128] sm:$0xff]
        %v369 = vld [vmem:[%s288 + $0x130] sm:$0xff]
        %v370 = vld [vmem:[%s288 + $0x138] sm:$0xff]
        %v371 = vld [vmem:[%s288 + $0x140] sm:$0xff]
        %v372 = vld [vmem:[%s288 + $0x148] sm:$0xff]
        %v373 = vld [vmem:[%s288 + $0x150] sm:$0xff]
        %v374 = vld [vmem:[%s288 + $0x158] sm:$0xff]
        %v375 = vld [vmem:[%s288 + $0x160] sm:$0xff]
        %v376 = vld [vmem:[%s288 + $0x168] sm:$0xff]
        %v377 = vld [vmem:[%s288 + $0x170] sm:$0xff]
        %v378 = vld [vmem:[%s288 + $0x178] sm:$0xff]
        %v379 = vld [vmem:[%s288 + $0x180] sm:$0xff]
        %v380 = vld [vmem:[%s288 + $0x188] sm:$0xff]
        %v381 = vld [vmem:[%s288 + $0x190] sm:$0xff]
        %v382 = vld [vmem:[%s288 + $0x198] sm:$0xff]
        %v383 = vld [vmem:[%s288 + $0x1a0] sm:$0xff]
        %v384 = vld [vmem:[%s288 + $0x1a8] sm:$0xff]
        %v385 = vld [vmem:[%s288 + $0x1b0] sm:$0xff]
        %v386 = vld [vmem:[%s288 + $0x1b8] sm:$0xff]
        %v387 = vld [vmem:[%s288 + $0x1c0] sm:$0xff]
        %v388 = vld [vmem:[%s288 + $0x1c8] sm:$0xff]
        %v389 = vld [vmem:[%s288 + $0x1d0] sm:$0xff]
        %v390 = vld [vmem:[%s288 + $0x1d8] sm:$0xff]
        %v391 = vld [vmem:[%s288 + $0x1e0] sm:$0xff]
        %v392 = vld [vmem:[%s288 + $0x1e8] sm:$0xff]
        %v393 = vld [vmem:[%s288 + $0x1f0] sm:$0xff]
        %v394 = vld [vmem:[%s288 + $0x1f8] sm:$0xff]
        %v395 = vld [vmem:[#allocation2] sm:$0x1]
        %396 = vmatpush.msra.mxu0 %v346
        %397 = vmatpush.msra.mxu0 %v345
        %398 = vmatpush.msra.mxu0 %v344
        %399 = vmatpush.msra.mxu0 %v343
        %400 = vmatpush.msra.mxu0 %v342
        %401 = vmatpush.msra.mxu0 %v341
        %402 = vmatpush.msra.mxu0 %v340
        %403 = vmatpush.msra.mxu0 %v339
        %404 = vmatpush.msra.mxu0 %v338
        %405 = vmatpush.msra.mxu0 %v337
        %406 = vmatpush.msra.mxu0 %v336
        %407 = vmatpush.msra.mxu0 %v335
        %408 = vmatpush.msra.mxu0 %v334
        %409 = vmatpush.msra.mxu0 %v333
        %410 = vmatpush.msra.mxu0 %v332
        %411 = vmatpush.msra.mxu0 %v331
        %412 = vmatmul.f32.gmra.mxu0 1.0
        %v413 = vpop.f32.mrf.mxu0
        %v414 = vadd.f32 0.0, %v413
        %415 = vdwg.mxu0
        %416 = vmatpush.msra.mxu0 %v362
        %417 = vmatpush.msra.mxu0 %v361
        %418 = vmatpush.msra.mxu0 %v360
        %419 = vmatpush.msra.mxu0 %v359
        %420 = vmatpush.msra.mxu0 %v358
        %421 = vmatpush.msra.mxu0 %v357
        %422 = vmatpush.msra.mxu0 %v356
        %423 = vmatpush.msra.mxu0 %v355
        %424 = vmatpush.msra.mxu0 %v354
        %425 = vmatpush.msra.mxu0 %v353
        %426 = vmatpush.msra.mxu0 %v352
        %427 = vmatpush.msra.mxu0 %v351
        %428 = vmatpush.msra.mxu0 %v350
        %429 = vmatpush.msra.mxu0 %v349
        %430 = vmatpush.msra.mxu0 %v348
        %431 = vmatpush.msra.mxu0 %v347
        %432 = vmatmul.f32.gmra.mxu0 1.0
        %v433 = vpop.f32.mrf.mxu0
        %v434 = vadd.f32 %v414, %v433
        %435 = vdwg.mxu0
        %436 = vmatpush.msra.mxu0 %v378
        %437 = vmatpush.msra.mxu0 %v377
        %438 = vmatpush.msra.mxu0 %v376
        %439 = vmatpush.msra.mxu0 %v375
        %440 = vmatpush.msra.mxu0 %v374
        %441 = vmatpush.msra.mxu0 %v373
        %442 = vmatpush.msra.mxu0 %v372
        %443 = vmatpush.msra.mxu0 %v371
        %444 = vmatpush.msra.mxu0 %v370
        %445 = vmatpush.msra.mxu0 %v369
        %446 = vmatpush.msra.mxu0 %v368
        %447 = vmatpush.msra.mxu0 %v367
        %448 = vmatpush.msra.mxu0 %v366
        %449 = vmatpush.msra.mxu0 %v365
        %450 = vmatpush.msra.mxu0 %v364
        %451 = vmatpush.msra.mxu0 %v363
        %452 = vmatmul.f32.gmra.mxu0 1.0
        %v453 = vpop.f32.mrf.mxu0
        %v454 = vadd.f32 %v434, %v453
        %455 = vdwg.mxu0
        %456 = vmatpush.msra.mxu0 %v394
        %457 = vmatpush.msra.mxu0 %v393
        %458 = vmatpush.msra.mxu0 %v392
        %459 = vmatpush.msra.mxu0 %v391
        %460 = vmatpush.msra.mxu0 %v390
        %461 = vmatpush.msra.mxu0 %v389
        %462 = vmatpush.msra.mxu0 %v388
        %463 = vmatpush.msra.mxu0 %v387
        %464 = vmatpush.msra.mxu0 %v386
        %465 = vmatpush.msra.mxu0 %v385
        %466 = vmatpush.msra.mxu0 %v384
        %467 = vmatpush.msra.mxu0 %v383
        %468 = vmatpush.msra.mxu0 %v382
        %469 = vmatpush.msra.mxu0 %v381
        %470 = vmatpush.msra.mxu0 %v380
        %471 = vmatpush.msra.mxu0 %v379
        %472 = vmatmul.f32.gmra.mxu0 1.0
        %v473 = vpop.f32.mrf.mxu0
        %v474 = vadd.f32 %v454, %v473
        %475 = vdwg.mxu0
        %v476 = vadd.f32 %v395, %v474
        %477 = vst [vmem:[#allocation2] sm:$0x1] %v476
        %v478 = vld [vmem:[#allocation3] sm:$0x1]
        %v479 = vmul.f32 %v331, %v331
        %v480 = vmul.f32 %v332, %v332
        %v481 = vmul.f32 %v333, %v333
        %v482 = vmul.f32 %v334, %v334
        %v483 = vmul.f32 %v335, %v335
        %v484 = vmul.f32 %v336, %v336
        %v485 = vmul.f32 %v337, %v337
        %v486 = vmul.f32 %v338, %v338
        %v487 = vmul.f32 %v339, %v339
        %v488 = vmul.f32 %v340, %v340
        %v489 = vmul.f32 %v341, %v341
        %v490 = vmul.f32 %v342, %v342
        %v491 = vmul.f32 %v343, %v343
        %v492 = vmul.f32 %v344, %v344
        %v493 = vmul.f32 %v345, %v345
        %v494 = vmul.f32 %v346, %v346
        %v495 = vmul.f32 %v347, %v347
        %v496 = vmul.f32 %v348, %v348
        %v497 = vmul.f32 %v349, %v349
        %v498 = vmul.f32 %v350, %v350
        %v499 = vmul.f32 %v351, %v351
        %v500 = vmul.f32 %v352, %v352
        %v501 = vmul.f32 %v353, %v353
        %v502 = vmul.f32 %v354, %v354
        %v503 = vmul.f32 %v355, %v355
        %v504 = vmul.f32 %v356, %v356
        %v505 = vmul.f32 %v357, %v357
        %v506 = vmul.f32 %v358, %v358
        %v507 = vmul.f32 %v359, %v359
        %v508 = vmul.f32 %v360, %v360
        %v509 = vmul.f32 %v361, %v361
        %v510 = vmul.f32 %v362, %v362
        %v511 = vmul.f32 %v363, %v363
        %v512 = vmul.f32 %v364, %v364
        %v513 = vmul.f32 %v365, %v365
        %v514 = vmul.f32 %v366, %v366
        %v515 = vmul.f32 %v367, %v367
        %v516 = vmul.f32 %v368, %v368
        %v517 = vmul.f32 %v369, %v369
        %v518 = vmul.f32 %v370, %v370
        %v519 = vmul.f32 %v371, %v371
        %v520 = vmul.f32 %v372, %v372
        %v521 = vmul.f32 %v373, %v373
        %v522 = vmul.f32 %v374, %v374
        %v523 = vmul.f32 %v375, %v375
        %v524 = vmul.f32 %v376, %v376
        %v525 = vmul.f32 %v377, %v377
        %v526 = vmul.f32 %v378, %v378
        %v527 = vmul.f32 %v379, %v379
        %v528 = vmul.f32 %v380, %v380
        %v529 = vmul.f32 %v381, %v381
        %v530 = vmul.f32 %v382, %v382
        %v531 = vmul.f32 %v383, %v383
        %v532 = vmul.f32 %v384, %v384
        %v533 = vmul.f32 %v385, %v385
        %v534 = vmul.f32 %v386, %v386
        %v535 = vmul.f32 %v387, %v387
        %v536 = vmul.f32 %v388, %v388
        %v537 = vmul.f32 %v389, %v389
        %v538 = vmul.f32 %v390, %v390
        %v539 = vmul.f32 %v391, %v391
        %v540 = vmul.f32 %v392, %v392
        %v541 = vmul.f32 %v393, %v393
        %v542 = vmul.f32 %v394, %v394
        %543 = vmatpush.msra.mxu0 %v494
        %544 = vmatpush.msra.mxu0 %v493
        %545 = vmatpush.msra.mxu0 %v492
        %546 = vmatpush.msra.mxu0 %v491
        %547 = vmatpush.msra.mxu0 %v490
        %548 = vmatpush.msra.mxu0 %v489
        %549 = vmatpush.msra.mxu0 %v488
        %550 = vmatpush.msra.mxu0 %v487
        %551 = vmatpush.msra.mxu0 %v486
        %552 = vmatpush.msra.mxu0 %v485
        %553 = vmatpush.msra.mxu0 %v484
        %554 = vmatpush.msra.mxu0 %v483
        %555 = vmatpush.msra.mxu0 %v482
        %556 = vmatpush.msra.mxu0 %v481
        %557 = vmatpush.msra.mxu0 %v480
        %558 = vmatpush.msra.mxu0 %v479
        %559 = vmatmul.f32.gmra.mxu0 1.0
        %v560 = vpop.f32.mrf.mxu0
        %v561 = vadd.f32 0.0, %v560
        %562 = vdwg.mxu0
        %563 = vmatpush.msra.mxu0 %v510
        %564 = vmatpush.msra.mxu0 %v509
        %565 = vmatpush.msra.mxu0 %v508
        %566 = vmatpush.msra.mxu0 %v507
        %567 = vmatpush.msra.mxu0 %v506
        %568 = vmatpush.msra.mxu0 %v505
        %569 = vmatpush.msra.mxu0 %v504
        %570 = vmatpush.msra.mxu0 %v503
        %571 = vmatpush.msra.mxu0 %v502
        %572 = vmatpush.msra.mxu0 %v501
        %573 = vmatpush.msra.mxu0 %v500
        %574 = vmatpush.msra.mxu0 %v499
        %575 = vmatpush.msra.mxu0 %v498
        %576 = vmatpush.msra.mxu0 %v497
        %577 = vmatpush.msra.mxu0 %v496
        %578 = vmatpush.msra.mxu0 %v495
        %579 = vmatmul.f32.gmra.mxu0 1.0
        %v580 = vpop.f32.mrf.mxu0
        %v581 = vadd.f32 %v561, %v580
        %582 = vdwg.mxu0
        %583 = vmatpush.msra.mxu0 %v526
        %584 = vmatpush.msra.mxu0 %v525
        %585 = vmatpush.msra.mxu0 %v524
        %586 = vmatpush.msra.mxu0 %v523
        %587 = vmatpush.msra.mxu0 %v522
        %588 = vmatpush.msra.mxu0 %v521
        %589 = vmatpush.msra.mxu0 %v520
        %590 = vmatpush.msra.mxu0 %v519
        %591 = vmatpush.msra.mxu0 %v518
        %592 = vmatpush.msra.mxu0 %v517
        %593 = vmatpush.msra.mxu0 %v516
        %594 = vmatpush.msra.mxu0 %v515
        %595 = vmatpush.msra.mxu0 %v514
        %596 = vmatpush.msra.mxu0 %v513
        %597 = vmatpush.msra.mxu0 %v512
        %598 = vmatpush.msra.mxu0 %v511
        %599 = vmatmul.f32.gmra.mxu0 1.0
        %v600 = vpop.f32.mrf.mxu0
        %v601 = vadd.f32 %v581, %v600
        %602 = vdwg.mxu0
        %603 = vmatpush.msra.mxu0 %v542
        %604 = vmatpush.msra.mxu0 %v541
        %605 = vmatpush.msra.mxu0 %v540
        %606 = vmatpush.msra.mxu0 %v539
        %607 = vmatpush.msra.mxu0 %v538
        %608 = vmatpush.msra.mxu0 %v537
        %609 = vmatpush.msra.mxu0 %v536
        %610 = vmatpush.msra.mxu0 %v535
        %611 = vmatpush.msra.mxu0 %v534
        %612 = vmatpush.msra.mxu0 %v533
        %613 = vmatpush.msra.mxu0 %v532
        %614 = vmatpush.msra.mxu0 %v531
        %615 = vmatpush.msra.mxu0 %v530
        %616 = vmatpush.msra.mxu0 %v529
        %617 = vmatpush.msra.mxu0 %v528
        %618 = vmatpush.msra.mxu0 %v527
        %619 = vmatmul.f32.gmra.mxu0 1.0
        %v620 = vpop.f32.mrf.mxu0
        %v621 = vadd.f32 %v601, %v620
        %622 = vdwg.mxu0
        %v623 = vadd.f32 %v478, %v621
        %624 = vst [vmem:[#allocation3] sm:$0x1] %v623
        %p625 = scmp.eq.s32.totalorder %s30, 3
        // Predicated region
        $region45: #{tpu_custom_call.1} parent=31 // pred_check
          %p626 = pneg %p625
        $region46: #{tpu_custom_call.1} parent=31 // pred_check_branch
          %628 = sbr.rel (%p626) target = $region48
        $region47: #{tpu_custom_call.1} parent=31 // pred_region
          %v629 = vld [vmem:[#allocation2] sm:$0x1]
          %v630 = vmul.f32 %v629, 0.00048828125
          %v631 = vld [vmem:[#allocation3] sm:$0x1]
          %v632 = vmul.f32 %v631, 0.00048828125
          %v633 = vmul.f32 %v630, %v630
          %v634 = vsub.f32 %v632, %v633
          %v635 = vmax.f32 %v634, 0.0
          %v636 = vadd.f32 %v635, 1e-05
          %v637 = vrsqrt.pop %v636
          %v638 = vmul.f32 %v637, %v636
          %v639 = vmul.f32 %v638, %v637
          %v640 = vmul.f32 0.5, %v639
          %v641 = vsub.f32 1.5, %v640
          %v642 = vmul.f32 %v637, %v641
          %vm643 = vweird.f32 %v636
          %vm644 = vweird.f32 %v637
          %vm645 = vmor %vm643, %vm644
          %v646 = vsel %vm645, %v637, %v642
          %v647 = vld [vmem:[#allocation7] sm:$0x1]
          %v648 = vmul.f32 %v647, %v646
          %649 = vst [vmem:[#allocation9] sm:$0x1] %v648
          %v650 = vld [vmem:[%s324] sm:$0x1]
          %v651 = vmul.f32 %v630, %v648
          %v652 = vsub.f32 %v650, %v651
          %653 = vst [vmem:[#allocation10] sm:$0x1] %v652
          %654 = vst [vmem:[#allocation12] sm:$0x1] %v630
          %655 = vst [vmem:[#allocation13] sm:$0x1] %v635
        $region48: #{tpu_custom_call.1} parent=31 // pred_fallthru
          _
        // Predicated region
        $region49: #{tpu_custom_call.1} parent=31 // pred_check
          %p656 = pneg %p135
        $region50: #{tpu_custom_call.1} parent=31 // pred_check_branch
          %658 = sbr.rel (%p656) target = $region52
        $region51: #{tpu_custom_call.1} parent=31 // pred_region
          %660 = vsyncadd [#allocation6], 0
          %s661 = scalar_lea.hbm %s3, %s29
          %s663 = sshll.u32 [#allocation9], 4
          %s664 = int_to_ptr.vmem [resolvable:$true] %s663
          %s665 = sshll.u32 %s661, 4
          %s666 = int_to_ptr.hbm [resolvable:$true] %s665
          %668 = dma.vmem_to_hbm [thread:$0]  %s664, 16, %s666, [#allocation6]
        $region52: #{tpu_custom_call.1} parent=31 // pred_fallthru
          _
        // Predicated region
        $region53: #{tpu_custom_call.1} parent=31 // pred_check
          %p669 = pneg %p161
        $region54: #{tpu_custom_call.1} parent=31 // pred_check_branch
          %671 = sbr.rel (%p669) target = $region56
        $region55: #{tpu_custom_call.1} parent=31 // pred_region
          %673 = vsyncadd [#allocation11], 0
          %s674 = scalar_lea.hbm %s4, %s29
          %s676 = sshll.u32 [#allocation10], 4
          %s677 = int_to_ptr.vmem [resolvable:$true] %s676
          %s678 = sshll.u32 %s674, 4
          %s679 = int_to_ptr.hbm [resolvable:$true] %s678
          %681 = dma.vmem_to_hbm [thread:$0]  %s677, 16, %s679, [#allocation11]
        $region56: #{tpu_custom_call.1} parent=31 // pred_fallthru
          _
        // Predicated region
        $region57: #{tpu_custom_call.1} parent=31 // pred_check
          %p682 = pneg %p187
        $region58: #{tpu_custom_call.1} parent=31 // pred_check_branch
          %684 = sbr.rel (%p682) target = $region60
        $region59: #{tpu_custom_call.1} parent=31 // pred_region
          %686 = vsyncadd [#allocation11], 0
          %s687 = scalar_lea.hbm %s5, %s29
          %s689 = sshll.u32 [#allocation12], 4
          %s690 = int_to_ptr.vmem [resolvable:$true] %s689
          %s691 = sshll.u32 %s687, 4
          %s692 = int_to_ptr.hbm [resolvable:$true] %s691
          %694 = dma.vmem_to_hbm [thread:$0]  %s690, 16, %s692, [#allocation11]
        $region60: #{tpu_custom_call.1} parent=31 // pred_fallthru
          _
        // Predicated region
        $region61: #{tpu_custom_call.1} parent=31 // pred_check
          %p695 = pneg %p213
        $region62: #{tpu_custom_call.1} parent=31 // pred_check_branch
          %697 = sbr.rel (%p695) target = $region64
        $region63: #{tpu_custom_call.1} parent=31 // pred_region
          %699 = vsyncadd [#allocation14], 0
          %s700 = scalar_lea.hbm %s6, %s29
          %s702 = sshll.u32 [#allocation13], 4
          %s703 = int_to_ptr.vmem [resolvable:$true] %s702
          %s704 = sshll.u32 %s700, 4
          %s705 = int_to_ptr.hbm [resolvable:$true] %s704
          %707 = dma.vmem_to_hbm [thread:$0]  %s703, 16, %s705, [#allocation14]
        $region64: #{tpu_custom_call.1} parent=31 // pred_fallthru
          _
        // Predicated region
        $region65: #{tpu_custom_call.1} parent=31 // pred_check
          %p708 = pneg %p135
        $region66: #{tpu_custom_call.1} parent=31 // pred_check_branch
          %710 = sbr.rel (%p708) target = $region68
        $region67: #{tpu_custom_call.1} parent=31 // pred_region
          %712 = dma.done [#allocation6], 16
        $region68: #{tpu_custom_call.1} parent=31 // pred_fallthru
          _
        // Predicated region
        $region69: #{tpu_custom_call.1} parent=31 // pred_check
          %p713 = pneg %p161
        $region70: #{tpu_custom_call.1} parent=31 // pred_check_branch
          %715 = sbr.rel (%p713) target = $region72
        $region71: #{tpu_custom_call.1} parent=31 // pred_region
          %717 = dma.done [#allocation11], 16
        $region72: #{tpu_custom_call.1} parent=31 // pred_fallthru
          _
        // Predicated region
        $region73: #{tpu_custom_call.1} parent=31 // pred_check
          %p718 = pneg %p187
        $region74: #{tpu_custom_call.1} parent=31 // pred_check_branch
          %720 = sbr.rel (%p718) target = $region76
        $region75: #{tpu_custom_call.1} parent=31 // pred_region
          %722 = dma.done [#allocation11], 16
        $region76: #{tpu_custom_call.1} parent=31 // pred_fallthru
          _
        // Predicated region
        $region77: #{tpu_custom_call.1} parent=31 // pred_check
          %p723 = pneg %p213
        $region78: #{tpu_custom_call.1} parent=31 // pred_check_branch
          %725 = sbr.rel (%p723) target = $region80
        $region79: #{tpu_custom_call.1} parent=31 // pred_region
          %727 = dma.done [#allocation14], 16
        $region80: #{tpu_custom_call.1} parent=31 // pred_fallthru
          _
      $region32: #{tpu_custom_call.1} parent=5 // pred_fallthru
        _
      %p728 = scmp.le.s32.totalorder 2, %s20
      // Predicated region
      $region81: #{tpu_custom_call.1} parent=5 // pred_check
        %p729 = pneg %p728
      $region82: #{tpu_custom_call.1} parent=5 // pred_check_branch
        %731 = sbr.rel (%p729) target = $region84
      $region83: #{tpu_custom_call.1} parent=5 // pred_region
        %s732 = ssub.s32 %s20, 2
      $region84: #{tpu_custom_call.1} parent=5 // pred_fallthru
        _
    $region6: #{tpu_custom_call.1} parent=1 // loop_footer
      %s24 = sadd.s32 1, %s20
    $region7: #{tpu_custom_call.1} parent=1 // loop_footer_branch
      %19 = sbr.rel target = $region3
    $region8: #{tpu_custom_call.1} parent=1 // loop_exit
      _
    %733 = vsyncpa [#allocation5], 1
    %s734 = scalar_lea.sflag [#allocation5], 1
    %735 = vsyncpa %s734, 1
    %736 = vsyncpa [#allocation8], 1
    %737 = vsyncpa [#allocation6], 1
    %s738 = scalar_lea.sflag [#allocation6], 1
    %739 = vsyncpa %s738, 1
    %740 = vsyncpa [#allocation11], 1
    %741 = vsyncpa [#allocation14], 1

</llo_original>
